<compile_context>
chip_gen: v6e
topology: v6e:2x2x1
jax: 0.10.0
libtpu: 0.0.40
codegen_flags: <defaults>
</compile_context>

<pallas_src>
import jax
import jax.numpy as jnp
from jax.experimental import pallas as pl
from jax.experimental.pallas import tpu as pltpu


def _round_up(x, m):
    return ((x + m - 1) // m) * m


def _vmem_capacity_bytes():
    try:
        return int(pltpu.get_tpu_info().vmem_capacity_bytes)
    except Exception:
        return 64 * 1024 * 1024  # conservative (v7x-sized) fallback


def vanilla_classifier_v0(pred, target, *, max_block_rows=1024,
                          block_bytes_budget=None, vmem_limit_bytes=None):
    """pred: (B, C) float logits, target: (B,) int class ids -> scalar f32 loss."""
    B, C = pred.shape
    itemsize = jnp.dtype(pred.dtype).itemsize

    # Generation-aware sizing (v5e/v6e: 128 MiB VMEM; v7x: 64 MiB).
    vmem_cap = _vmem_capacity_bytes()
    if vmem_limit_bytes is None:
        vmem_limit_bytes = min(vmem_cap // 2, 64 * 1024 * 1024)
    if block_bytes_budget is None:
        block_bytes_budget = (6 * 1024 * 1024 if vmem_cap >= 128 * 1024 * 1024
                              else 3 * 1024 * 1024)

    # Sublane-packing alignment: 8 rows/vreg for f32, 16 for bf16, 32 for 1-byte.
    row_align = max(8, 32 // itemsize)
    rows_fit = max(row_align,
                   (block_bytes_budget // max(1, C * itemsize)) // row_align * row_align)
    TB = min(max_block_rows, rows_fit, _round_up(B, row_align))
    # Prefer >= 2 tiles so both v7x TensorCores get work (no-op for tiny B).
    if TB >= B and B > row_align:
        TB = _round_up(pl.cdiv(B, 2), row_align)
    num_tiles = pl.cdiv(B, TB)

    tgt2d = target.astype(jnp.int32).reshape(B, 1)

    def kernel(pred_ref, tgt_ref, out_ref):
        # pred_ref: (TB, C) logits (original dtype), tgt_ref: (TB, 1) int32,
        # out_ref:  (8, 128) f32 lane-dense slab; per-tile sum lands at [0, 0].
        x = pred_ref[...].astype(jnp.float32)                        # (TB, C) f32
        tb, c = x.shape
        tgt = tgt_ref[...]                                           # (TB, 1) int32

        # picked = x[row, target[row]] via lane-index compare (no one-hot temp).
        col = jax.lax.broadcasted_iota(jnp.int32, (tb, c), 1)
        picked = jnp.sum(jnp.where(col == tgt, x, 0.0),
                         axis=1, keepdims=True)                      # (TB, 1)

        # Numerically-stable log-sum-exp per row; shifted tensor dies after exp.
        m = jnp.max(x, axis=1, keepdims=True)                        # (TB, 1)
        se = jnp.sum(jnp.exp(x - m), axis=1, keepdims=True)          # (TB, 1)
        lse = m + jnp.log(se)                                        # (TB, 1)

        # Mask rows of the (possibly partial) last tile BEFORE the cross-row sum
        # so garbage/NaN in the overhang never reaches the per-tile partial sum.
        row = pl.program_id(0) * tb + jax.lax.broadcasted_iota(jnp.int32, (tb, 1), 0)
        loss_row = jnp.where(row < B, lse - picked, 0.0)             # (TB, 1)

        tile_sum = jnp.sum(loss_row, axis=0, keepdims=True)          # (1, 1)

        # Write one fully aligned (8, 128) vreg per tile; sum sits at [0, 0].
        sub = jax.lax.broadcasted_iota(jnp.int32, (8, 128), 0)
        lane = jax.lax.broadcasted_iota(jnp.int32, (8, 128), 1)
        out_ref[...] = jnp.where((sub == 0) & (lane == 0), tile_sum, 0.0)

    partial = pl.pallas_call(
        kernel,
        grid=(num_tiles,),
        out_shape=jax.ShapeDtypeStruct((num_tiles * 8, 128), jnp.float32),
        in_specs=[
            pl.BlockSpec((TB, C), lambda i: (i, 0)),   # logits tile (original dtype)
            pl.BlockSpec((TB, 1), lambda i: (i, 0)),   # targets tile
        ],
        out_specs=pl.BlockSpec((8, 128), lambda i: (i, 0)),
        compiler_params=pltpu.CompilerParams(
            # Independent output block per tile -> shardable across TCs (v7x).
            dimension_semantics=("parallel",),
            vmem_limit_bytes=int(vmem_limit_bytes),
        ),
    )(pred, tgt2d)

    # Tiny epilogue: num_tiles * 1024 f32 (all zeros except lane/sublane 0).
    return jnp.sum(partial) / B


def _reference(pred, target):
    # Pure-JAX reference matching the PyTorch forward (stable log-softmax form).
    B, C = pred.shape
    log_soft = jax.nn.log_softmax(pred.astype(jnp.float32), axis=1)
    onehot = jax.nn.one_hot(target, C, dtype=jnp.float32)
    return (-1.0 / B) * jnp.sum(log_soft * onehot)


if __name__ == "__main__":
    key = jax.random.PRNGKey(0)
    k1, k2, k3, k4 = jax.random.split(key, 4)

    # Small shapes consistent with the module's (B, C) logits / (B,) targets.
    B, C = 8, 32
    pred = jax.random.normal(k1, (B, C), dtype=jnp.float32)
    target = jax.random.randint(k2, (B,), 0, C, dtype=jnp.int32)
    loss = vanilla_classifier_v0(pred, target)
    jax.block_until_ready(loss)
    ref = _reference(pred, target)
    assert jnp.allclose(loss, ref, atol=1e-5, rtol=1e-5), (loss, ref)

    # Second check: multi-tile grid + partial last tile (exercises the row mask).
    B2, C2 = 20, 160
    pred2 = jax.random.normal(k3, (B2, C2), dtype=jnp.float32)
    target2 = jax.random.randint(k4, (B2,), 0, C2, dtype=jnp.int32)
    loss2 = vanilla_classifier_v0(pred2, target2)
    jax.block_until_ready(loss2)
    ref2 = _reference(pred2, target2)
    assert jnp.allclose(loss2, ref2, atol=1e-5, rtol=1e-5), (loss2, ref2)

    print("KERNEL_OK")
</pallas_src>

<mosaic_0001>
module attributes {stable_mosaic.version = 11 : i64} {
  func.func @kernel(%arg0: i32, %arg1: memref<8x32xf32, #tpu.memory_space<vmem>>, %arg2: memref<8x1xi32, #tpu.memory_space<vmem>>, %arg3: memref<8x128xf32, #tpu.memory_space<vmem>>) attributes {dimension_semantics = [#tpu.dimension_semantics<parallel>], iteration_bounds = array<i64: 1>, scalar_prefetch = 0 : i64, scratch_operands = 0 : i64, tpu.core_type = #tpu.core_type<tc>, window_params = [{transform_indices = @transform_0, window_bounds = array<i64: 8, 32>}, {transform_indices = @transform_1, window_bounds = array<i64: 8, 1>}, {transform_indices = @transform_2, window_bounds = array<i64: 8, 128>}]} {
    %c0 = arith.constant 0 : index
    %c0_0 = arith.constant 0 : index
    %0 = vector.load %arg1[%c0, %c0_0] : memref<8x32xf32, #tpu.memory_space<vmem>>, vector<8x32xf32>
    %c0_1 = arith.constant 0 : index
    %c0_2 = arith.constant 0 : index
    %1 = vector.load %arg2[%c0_1, %c0_2] : memref<8x1xi32, #tpu.memory_space<vmem>>, vector<8x1xi32>
    %2 = tpu.iota {dimensions = array<i32: 1>} : vector<8x32xi32>
    %3 = vector.broadcast %1 : vector<8x1xi32> to vector<8x32xi32>
    %4 = arith.cmpi eq, %2, %3 : vector<8x32xi32>
    %cst = arith.constant 0.000000e+00 : f32
    %5 = vector.broadcast %cst : f32 to vector<8x32xf32>
    %6 = arith.select %4, %0, %5 : vector<8x32xi1>, vector<8x32xf32>
    %cst_3 = arith.constant dense<0.000000e+00> : vector<8xf32>
    %7 = vector.multi_reduction <add>, %6, %cst_3 [1] : vector<8x32xf32> to vector<8xf32>
    %8 = vector.shape_cast %7 : vector<8xf32> to vector<8x1xf32>
    %cst_4 = arith.constant dense<0xFF800000> : vector<8xf32>
    %9 = vector.multi_reduction <maximumf>, %0, %cst_4 [1] : vector<8x32xf32> to vector<8xf32>
    %10 = vector.shape_cast %9 : vector<8xf32> to vector<8x1xf32>
    %11 = vector.broadcast %10 : vector<8x1xf32> to vector<8x32xf32>
    %12 = arith.subf %0, %11 : vector<8x32xf32>
    %13 = math.exp %12 : vector<8x32xf32>
    %cst_5 = arith.constant dense<0.000000e+00> : vector<8xf32>
    %14 = vector.multi_reduction <add>, %13, %cst_5 [1] : vector<8x32xf32> to vector<8xf32>
    %15 = vector.shape_cast %14 : vector<8xf32> to vector<8x1xf32>
    %16 = math.log %15 : vector<8x1xf32>
    %17 = arith.addf %10, %16 : vector<8x1xf32>
    %c8_i32 = arith.constant 8 : i32
    %18 = arith.muli %arg0, %c8_i32 : i32
    %19 = tpu.iota {dimensions = array<i32: 0>} : vector<8x1xi32>
    %20 = vector.broadcast %18 : i32 to vector<8x1xi32>
    %21 = arith.addi %20, %19 : vector<8x1xi32>
    %c8_i32_6 = arith.constant 8 : i32
    %22 = vector.broadcast %c8_i32_6 : i32 to vector<8x1xi32>
    %23 = arith.cmpi slt, %21, %22 : vector<8x1xi32>
    %24 = arith.subf %17, %8 : vector<8x1xf32>
    %cst_7 = arith.constant 0.000000e+00 : f32
    %25 = vector.broadcast %cst_7 : f32 to vector<8x1xf32>
    %26 = arith.select %23, %24, %25 : vector<8x1xi1>, vector<8x1xf32>
    %cst_8 = arith.constant dense<0.000000e+00> : vector<1xf32>
    %27 = vector.multi_reduction <add>, %26, %cst_8 [0] : vector<8x1xf32> to vector<1xf32>
    %28 = vector.shape_cast %27 : vector<1xf32> to vector<1x1xf32>
    %29 = tpu.iota {dimensions = array<i32: 0>} : vector<8x128xi32>
    %30 = tpu.iota {dimensions = array<i32: 1>} : vector<8x128xi32>
    %c0_i32 = arith.constant 0 : i32
    %31 = vector.broadcast %c0_i32 : i32 to vector<8x128xi32>
    %32 = arith.cmpi eq, %29, %31 : vector<8x128xi32>
    %c0_i32_9 = arith.constant 0 : i32
    %33 = vector.broadcast %c0_i32_9 : i32 to vector<8x128xi32>
    %34 = arith.cmpi eq, %30, %33 : vector<8x128xi32>
    %35 = arith.andi %32, %34 : vector<8x128xi1>
    %cst_10 = arith.constant 0.000000e+00 : f32
    %36 = vector.shape_cast %28 : vector<1x1xf32> to vector<1x1xf32>
    %37 = vector.broadcast %36 : vector<1x1xf32> to vector<8x128xf32>
    %38 = vector.broadcast %cst_10 : f32 to vector<8x128xf32>
    %39 = arith.select %35, %37, %38 : vector<8x128xi1>, vector<8x128xf32>
    %c0_11 = arith.constant 0 : index
    %c0_12 = arith.constant 0 : index
    %40 = vector.load %arg3[%c0_11, %c0_12] : memref<8x128xf32, #tpu.memory_space<vmem>>, vector<8x128xf32>
    tpu.vector_store %arg3[%c0_11, %c0_12], %39 {strides = array<i32>} : memref<8x128xf32, #tpu.memory_space<vmem>>, vector<8x128xf32>,
    return
  }
  func.func @transform_0(%arg0: i32) -> (i32, i32) {
    %c0_i32 = arith.constant 0 : i32
    %c0_i32_0 = arith.constant 0 : i32
    return %arg0, %c0_i32 : i32, i32
  }
  func.func @transform_1(%arg0: i32) -> (i32, i32) {
    %c0_i32 = arith.constant 0 : i32
    %c0_i32_0 = arith.constant 0 : i32
    return %arg0, %c0_i32 : i32, i32
  }
  func.func @transform_2(%arg0: i32) -> (i32, i32) {
    %c0_i32 = arith.constant 0 : i32
    %c0_i32_0 = arith.constant 0 : i32
    return %arg0, %c0_i32 : i32, i32
  }
}

</mosaic_0001>

<llo_original>
// kernel: tpu_custom_call.1
$region0: #{tpu_custom_call.1}
  #allocation0 [shape = 'u32[]', space=smem, size = 0x4, offset = 0x4, fixed_abs, tag = 'smem constant byte address 0x4 - core index']
  #allocation1 [shape = 'u32[144,128]{1,0:T(1,128)}', space=vmem, size = 0x12000, scoped, tag = 'internal scratch']
  %s0 = inlined_call_operand.vmem [shape: f32[8,32], index: 0, kind: input, shape index: {}]
  %s1 = inlined_call_operand.vmem [shape: s32[8,1], index: 1, kind: input, shape index: {}]
  %s2 = inlined_call_operand.hbm [shape: f32[8,128], index: 2, kind: output, shape index: {}]
  %s3 = sld [smem:[#allocation0]]
  $region18: #{tpu_custom_call.1} parent=0
    _
  %s5 = ssub.s32 1, %s3
  %s6 = scalar_select 0, %s5, %s3
  $region1: #{tpu_custom_call.1} parent=0
    #allocation2 [shape = 'u8[4096]{0}', space=vmem, size = 0x1000, scoped, tag = 'output window, operand 0, single buffered']
    #allocation3 [shape = 's32[1]{0}', space=sflag, size = 0x4, scoped, tag = 'scoped memory for tpu_custom_call.1']
    %7 = vsyncpa [#allocation3], 0
    // Predicated region
    $region2: #{tpu_custom_call.1} parent=1 // pred_check
      _
    $region3: #{tpu_custom_call.1} parent=1 // pred_check_branch
      %9 = sbr.rel (0) target = $region5
    $region4: #{tpu_custom_call.1} parent=1 // pred_region
      _
    $region5: #{tpu_custom_call.1} parent=1 // pred_fallthru
      _
    // Predicated region
    $region6: #{tpu_custom_call.1} parent=1 // pred_check
      _
    $region7: #{tpu_custom_call.1} parent=1 // pred_check_branch
      %11 = sbr.rel (0) target = $region9
    $region8: #{tpu_custom_call.1} parent=1 // pred_region
      _
    $region9: #{tpu_custom_call.1} parent=1 // pred_fallthru
      _
    %v12 = vld [vmem:[%s0] sm:$0xff]
    %v13 = vld [vmem:[%s1] sm:$0xff]
    %v14 = vlaneseq
    %v15 = vand.u32 %v14, 127
    %16 = vset.pattern.permute.xlu0 0
    %17 = vperm.xlu0 %16, %v13
    %v18 = vpop.permute.xlu0 %17
    %vm19 = vcmp.eq.s32.totalorder %v15, %v18
    %v20 = vsel %vm19, %v12, 0.0
    %vm21 = vcmask 261120
    %v22 = vsel %vm21, %v20, 0.0
    %23 = vadd.xlane.f32.xlu0 %v22
    %v24 = vpop.xlane.xlu0 %23
    %v25 = vsel %vm21, %v12, -inf
    %26 = vmax.xlane.f32.xlu0 %v25
    %v27 = vpop.xlane.xlu0 %26
    %v28 = vsub.f32 %v12, %v27
    %v29 = vmul.f32 %v28, 1.442695
    %v30 = vpow.pop %v29
    %v31 = vsel %vm21, %v30, 0.0
    %32 = vadd.xlane.f32.xlu0 %v31
    %v33 = vpop.xlane.xlu0 %32
    %v34 = vlog2.pop %v33
    %v35 = vmul.f32 %v34, 0.6931472
    %v36 = vadd.f32 %v27, %v35
    %s37 = smul.u32 0, 8
    %v38 = vlaneseq
    %v39 = vshrl.u32 %v38, 7
    %v40 = vstv %s37
    %v41 = vadd.s32 %v40, %v39
    %vm42 = vcmp.lt.s32.totalorder %v41, 8
    %v43 = vsub.f32 %v36, %v24
    %v44 = vsel %vm42, %v43, 0.0
    %v45 = vrot.slane %v44, 4
    %v46 = vadd.f32 %v44, %v45
    %v47 = vrot.slane %v46, 2
    %v48 = vadd.f32 %v46, %v47
    %v49 = vrot.slane %v48, 1
    %v50 = vadd.f32 %v48, %v49
    %vm51 = vcmp.eq.s32.totalorder %v39, 0
    %vm52 = vcmp.eq.s32.totalorder %v15, 0
    %vm53 = vmand %vm51, %vm52
    %v54 = vsel %vm53, %v50, 0.0
    %55 = vst [vmem:[#allocation2] sm:$0xff] %v54
    // Predicated region
    $region10: #{tpu_custom_call.1} parent=1 // pred_check
      _
    $region11: #{tpu_custom_call.1} parent=1 // pred_check_branch
      %57 = sbr.rel (0) target = $region13
    $region12: #{tpu_custom_call.1} parent=1 // pred_region
      %s59 = ssub.s32 128, 128
      %60 = vsyncadd [#allocation3], %s59
      %s62 = sshll.u32 [#allocation2], 4
      %s63 = int_to_ptr.vmem [resolvable:$true] %s62
      %65 = dma.vmem_to_hbm [thread:$0]  %s63, 128, %s2, [#allocation3]
    $region13: #{tpu_custom_call.1} parent=1 // pred_fallthru
      _
    // Predicated region
    $region14: #{tpu_custom_call.1} parent=1 // pred_check
      _
    $region15: #{tpu_custom_call.1} parent=1 // pred_check_branch
      %67 = sbr.rel (0) target = $region17
    $region16: #{tpu_custom_call.1} parent=1 // pred_region
      %68 = dma.done [#allocation3], 128
    $region17: #{tpu_custom_call.1} parent=1 // pred_fallthru
      _
    %69 = vsyncpa [#allocation3], 1

</llo_original>
